<compile_context>
chip_gen: v5e
topology: v5e:2x2
jax: 0.10.0
libtpu: 0.0.40
codegen_flags: <defaults>
</compile_context>

<pallas_src>
import math
import jax
import jax.numpy as jnp
from jax.experimental import pallas as pl
from jax.experimental.pallas import tpu as pltpu

MEAN_MIN, MEAN_MAX = -9.0, 9.0
LOG_STD_MIN, LOG_STD_MAX = -5.0, 2.0
_HALF_LOG_2PI = 0.5 * math.log(2.0 * math.pi)
_LOG2 = math.log(2.0)

# Max batch tile (rows). At H=512: fc1/fc2 intermediates are ~4 MiB each, weights
# ~1 MiB double-buffered, I/O tiles a few hundred KiB -> comfortably inside the
# 32 MiB scoped-VMEM default on every generation (incl. v7x's 64 MiB physical).
_TB_MAX = 2048


def _round_up(x, m):
    return ((x + m - 1) // m) * m


def _policy_kernel(s_ref, g_ref, eps_ref,
                   w1_ref, b1_ref,
                   w2_ref, b2_ref,
                   wh_ref, bh_ref,
                   out_ref):
    A = eps_ref.shape[-1]

    # fc1: single MXU push on the in-kernel lane concat of [state | goal] + relu
    x = jnp.concatenate([s_ref[...], g_ref[...]], axis=-1)
    h = jnp.dot(x, w1_ref[...], preferred_element_type=jnp.float32) + b1_ref[...]
    h = jnp.maximum(h, 0.0)

    # fc2 + relu
    h = jnp.dot(h, w2_ref[...], preferred_element_type=jnp.float32) + b2_ref[...]
    h = jnp.maximum(h, 0.0)

    # fused [mu | log_sigma] head: one MXU pass
    heads = jnp.dot(h, wh_ref[...], preferred_element_type=jnp.float32) + bh_ref[...]
    mu = jnp.clip(heads[:, :A], MEAN_MIN, MEAN_MAX)
    log_sigma = jnp.clip(heads[:, A:], LOG_STD_MIN, LOG_STD_MAX)
    sigma = jnp.exp(log_sigma)

    # rsample through TanhTransform
    # TODO(synk): eps stays a host-provided input (in-kernel PRNG would diverge
    # from the reference/PyTorch rsample noise stream).
    eps = eps_ref[...]
    x_pre = mu + sigma * eps
    action = jnp.tanh(x_pre)

    # Normal.log_prob at x_pre: (x_pre - mu)/sigma == eps exactly -> no divide
    normal_lp = -0.5 * eps * eps - log_sigma - _HALF_LOG_2PI
    # TanhTransform.log_abs_det_jacobian = 2*(log2 - x - softplus(-2x))
    log_det = 2.0 * (_LOG2 - x_pre - jax.nn.softplus(-2.0 * x_pre))
    logp = jnp.sum(normal_lp - log_det, axis=-1, keepdims=True)

    mode = jnp.tanh(mu)

    # Narrow lane-packed output: [action | mode | logp]  (2A+1 lanes)
    out_ref[...] = jnp.concatenate([action, mode, logp], axis=-1)


def pack_params(params):
    """One-time reorganisation of nn.Linear-style params into the kernel layout."""
    return dict(
        w1=params["w1"],
        b1=params["b1"],
        w2=params["w2"],
        b2=params["b2"],
        w_head=jnp.concatenate([params["w_mu"], params["w_sigma"]], axis=1),
        b_head=jnp.concatenate([params["b_mu"], params["b_sigma"]], axis=1),
    )


@jax.jit
def execute_policy_forward(state, goal, packed, eps):
    """Runs the full forward pass. Returns (action, logp_pi, a_tanh_mode)."""
    B, S = state.shape
    A = eps.shape[1]
    H = packed["w2"].shape[0]
    out_w = 2 * A + 1                      # true output width; no 128-lane padding

    # Batch tile: as big as possible while still yielding >=2 grid steps when B
    # is large (v7x 2-TC megacore); 8-aligned for the sublane constraint.
    tb = min(_TB_MAX, _round_up(pl.cdiv(B, 2), 8))
    grid = (pl.cdiv(B, tb),)               # ragged last tile; no wrapper-side pad

    state = state.astype(jnp.float32)      # no-op for f32 inputs
    goal = goal.astype(jnp.float32)
    eps = eps.astype(jnp.float32)

    def row_spec(n):
        return pl.BlockSpec((tb, n), lambda i: (i, 0))

    def w_spec(shape):
        return pl.BlockSpec(shape, lambda i: (0, 0))   # weights resident across grid

    weight_bytes = 4 * (2 * S * H + H + H * H + H + H * 2 * A + 2 * A)
    cost = pl.CostEstimate(
        flops=2 * B * (2 * S * H + H * H + H * 2 * A),
        transcendentals=4 * B * A,
        bytes_accessed=4 * B * (2 * S + A + out_w) + weight_bytes,
    )

    out = pl.pallas_call(
        _policy_kernel,
        out_shape=jax.ShapeDtypeStruct((B, out_w), jnp.float32),
        grid=grid,
        in_specs=[
            row_spec(S), row_spec(S), row_spec(A),
            w_spec((2 * S, H)), w_spec((1, H)),
            w_spec((H, H)), w_spec((1, H)),
            w_spec((H, 2 * A)), w_spec((1, 2 * A)),
        ],
        out_specs=row_spec(out_w),
        compiler_params=pltpu.CompilerParams(
            dimension_semantics=("parallel",)),
        cost_estimate=cost,
    )(state, goal, eps,
      packed["w1"], packed["b1"],
      packed["w2"], packed["b2"],
      packed["w_head"], packed["b_head"])

    action = out[:, :A]
    mode = out[:, A:2 * A]
    logp = out[:, 2 * A]
    return action, logp, mode


def _reference_forward(state, goal, params, eps):
    x = jnp.concatenate([state, goal], axis=1)
    h = jax.nn.relu(x @ params["w1"] + params["b1"][0])
    h = jax.nn.relu(h @ params["w2"] + params["b2"][0])
    mu = jnp.clip(h @ params["w_mu"] + params["b_mu"][0], MEAN_MIN, MEAN_MAX)
    log_sigma = jnp.clip(h @ params["w_sigma"] + params["b_sigma"][0],
                         LOG_STD_MIN, LOG_STD_MAX)
    sigma = jnp.exp(log_sigma)
    x_pre = mu + sigma * eps
    action = jnp.tanh(x_pre)
    normal_lp = -0.5 * ((x_pre - mu) / sigma) ** 2 - log_sigma - _HALF_LOG_2PI
    log_det = 2.0 * (_LOG2 - x_pre - jnp.logaddexp(-2.0 * x_pre, 0.0))
    logp = jnp.sum(normal_lp - log_det, axis=-1)
    return action, logp, jnp.tanh(mu)


def _init_linear(key, fan_in, fan_out):
    # Deterministic init mimicking nn.Linear (uniform +- 1/sqrt(fan_in)),
    # stored pre-transposed as [in, out]; bias stored as [1, out].
    kw, kb = jax.random.split(key)
    bound = 1.0 / math.sqrt(fan_in)
    w = jax.random.uniform(kw, (fan_in, fan_out), jnp.float32, -bound, bound)
    b = jax.random.uniform(kb, (1, fan_out), jnp.float32, -bound, bound)
    return w, b


if __name__ == "__main__":
    state_dim, action_dim, hidden_num = 8, 4, 32
    batch = 4

    root = jax.random.PRNGKey(0)
    k1, k2, k3, k4, ks, kg, ke = jax.random.split(root, 7)

    w1, b1 = _init_linear(k1, state_dim * 2, hidden_num)
    w2, b2 = _init_linear(k2, hidden_num, hidden_num)
    w_mu, b_mu = _init_linear(k3, hidden_num, action_dim)
    w_sg, b_sg = _init_linear(k4, hidden_num, action_dim)
    params = dict(w1=w1, b1=b1, w2=w2, b2=b2,
                  w_mu=w_mu, b_mu=b_mu, w_sigma=w_sg, b_sigma=b_sg)
    packed = pack_params(params)   # one-time repack into kernel layout

    state = jax.random.normal(ks, (batch, state_dim), jnp.float32)
    goal = jax.random.normal(kg, (batch, state_dim), jnp.float32)
    # rsample noise is generated host-side (deterministic) and fed to the kernel.
    eps = jax.random.normal(ke, (batch, action_dim), jnp.float32)

    action, logp_pi, a_tanh_mode = execute_policy_forward(state, goal, packed, eps)
    jax.block_until_ready((action, logp_pi, a_tanh_mode))

    ra, rl, rm = _reference_forward(state, goal, params, eps)
    assert jnp.allclose(action, ra, atol=1e-5), "action mismatch"
    assert jnp.allclose(logp_pi, rl, atol=1e-4), "logp mismatch"
    assert jnp.allclose(a_tanh_mode, rm, atol=1e-5), "mode mismatch"

    print("KERNEL_OK")
</pallas_src>

<mosaic_0001>
module attributes {stable_mosaic.version = 11 : i64} {
  func.func @_policy_kernel(%arg0: i32, %arg1: memref<8x8xf32, #tpu.memory_space<vmem>>, %arg2: memref<8x8xf32, #tpu.memory_space<vmem>>, %arg3: memref<8x4xf32, #tpu.memory_space<vmem>>, %arg4: memref<16x32xf32, #tpu.memory_space<vmem>>, %arg5: memref<1x32xf32, #tpu.memory_space<vmem>>, %arg6: memref<32x32xf32, #tpu.memory_space<vmem>>, %arg7: memref<1x32xf32, #tpu.memory_space<vmem>>, %arg8: memref<32x8xf32, #tpu.memory_space<vmem>>, %arg9: memref<1x8xf32, #tpu.memory_space<vmem>>, %arg10: memref<8x9xf32, #tpu.memory_space<vmem>>) attributes {dimension_semantics = [#tpu.dimension_semantics<parallel>], iteration_bounds = array<i64: 1>, scalar_prefetch = 0 : i64, scratch_operands = 0 : i64, tpu.core_type = #tpu.core_type<tc>, window_params = [{transform_indices = @transform_0, window_bounds = array<i64: 8, 8>}, {transform_indices = @transform_1, window_bounds = array<i64: 8, 8>}, {transform_indices = @transform_2, window_bounds = array<i64: 8, 4>}, {pipeline_mode = #tpu.pipeline_mode<synchronous>, transform_indices = @transform_3, window_bounds = array<i64: 16, 32>}, {pipeline_mode = #tpu.pipeline_mode<synchronous>, transform_indices = @transform_4, window_bounds = array<i64: 1, 32>}, {pipeline_mode = #tpu.pipeline_mode<synchronous>, transform_indices = @transform_5, window_bounds = array<i64: 32, 32>}, {pipeline_mode = #tpu.pipeline_mode<synchronous>, transform_indices = @transform_6, window_bounds = array<i64: 1, 32>}, {pipeline_mode = #tpu.pipeline_mode<synchronous>, transform_indices = @transform_7, window_bounds = array<i64: 32, 8>}, {pipeline_mode = #tpu.pipeline_mode<synchronous>, transform_indices = @transform_8, window_bounds = array<i64: 1, 8>}, {transform_indices = @transform_9, window_bounds = array<i64: 8, 9>}]} {
    %c0 = arith.constant 0 : index
    %c0_0 = arith.constant 0 : index
    %0 = vector.load %arg1[%c0, %c0_0] : memref<8x8xf32, #tpu.memory_space<vmem>>, vector<8x8xf32>
    %c0_1 = arith.constant 0 : index
    %c0_2 = arith.constant 0 : index
    %1 = vector.load %arg2[%c0_1, %c0_2] : memref<8x8xf32, #tpu.memory_space<vmem>>, vector<8x8xf32>
    %2 = tpu.concatenate %0, %1 in 1 : vector<8x8xf32>, vector<8x8xf32> -> vector<8x16xf32>
    %c0_3 = arith.constant 0 : index
    %c0_4 = arith.constant 0 : index
    %3 = vector.load %arg4[%c0_3, %c0_4] : memref<16x32xf32, #tpu.memory_space<vmem>>, vector<16x32xf32>
    %cst = arith.constant dense<0.000000e+00> : vector<8x32xf32>
    %4 = tpu.matmul %2, %3, %cst {dimension_numbers = #tpu.dot_dimension_numbers<[1], [0], [0], [1], [0, 0, 1, 1], [], []>} : vector<8x16xf32>, vector<16x32xf32>, vector<8x32xf32> -> vector<8x32xf32>
    %c0_5 = arith.constant 0 : index
    %c0_6 = arith.constant 0 : index
    %5 = vector.load %arg5[%c0_5, %c0_6] : memref<1x32xf32, #tpu.memory_space<vmem>>, vector<1x32xf32>
    %6 = vector.broadcast %5 : vector<1x32xf32> to vector<8x32xf32>
    %7 = arith.addf %4, %6 : vector<8x32xf32>
    %cst_7 = arith.constant 0.000000e+00 : f32
    %8 = vector.broadcast %cst_7 : f32 to vector<8x32xf32>
    %9 = arith.maximumf %7, %8 : vector<8x32xf32>
    %c0_8 = arith.constant 0 : index
    %c0_9 = arith.constant 0 : index
    %10 = vector.load %arg6[%c0_8, %c0_9] : memref<32x32xf32, #tpu.memory_space<vmem>>, vector<32x32xf32>
    %cst_10 = arith.constant dense<0.000000e+00> : vector<8x32xf32>
    %11 = tpu.matmul %9, %10, %cst_10 {dimension_numbers = #tpu.dot_dimension_numbers<[1], [0], [0], [1], [0, 0, 1, 1], [], []>} : vector<8x32xf32>, vector<32x32xf32>, vector<8x32xf32> -> vector<8x32xf32>
    %c0_11 = arith.constant 0 : index
    %c0_12 = arith.constant 0 : index
    %12 = vector.load %arg7[%c0_11, %c0_12] : memref<1x32xf32, #tpu.memory_space<vmem>>, vector<1x32xf32>
    %13 = vector.broadcast %12 : vector<1x32xf32> to vector<8x32xf32>
    %14 = arith.addf %11, %13 : vector<8x32xf32>
    %cst_13 = arith.constant 0.000000e+00 : f32
    %15 = vector.broadcast %cst_13 : f32 to vector<8x32xf32>
    %16 = arith.maximumf %14, %15 : vector<8x32xf32>
    %c0_14 = arith.constant 0 : index
    %c0_15 = arith.constant 0 : index
    %17 = vector.load %arg8[%c0_14, %c0_15] : memref<32x8xf32, #tpu.memory_space<vmem>>, vector<32x8xf32>
    %cst_16 = arith.constant dense<0.000000e+00> : vector<8x8xf32>
    %18 = tpu.matmul %16, %17, %cst_16 {dimension_numbers = #tpu.dot_dimension_numbers<[1], [0], [0], [1], [0, 0, 1, 1], [], []>} : vector<8x32xf32>, vector<32x8xf32>, vector<8x8xf32> -> vector<8x8xf32>
    %c0_17 = arith.constant 0 : index
    %c0_18 = arith.constant 0 : index
    %19 = vector.load %arg9[%c0_17, %c0_18] : memref<1x8xf32, #tpu.memory_space<vmem>>, vector<1x8xf32>
    %20 = vector.broadcast %19 : vector<1x8xf32> to vector<8x8xf32>
    %21 = arith.addf %18, %20 : vector<8x8xf32>
    %22 = vector.extract_strided_slice %21 {offsets = [0, 0], sizes = [8, 4], strides = [1, 1]} : vector<8x8xf32> to vector<8x4xf32>
    %cst_19 = arith.constant -9.000000e+00 : f32
    %cst_20 = arith.constant 9.000000e+00 : f32
    %23 = vector.broadcast %cst_19 : f32 to vector<8x4xf32>
    %24 = arith.maximumf %23, %22 : vector<8x4xf32>
    %25 = vector.broadcast %cst_20 : f32 to vector<8x4xf32>
    %26 = arith.minimumf %25, %24 : vector<8x4xf32>
    %27 = vector.extract_strided_slice %21 {offsets = [0, 4], sizes = [8, 4], strides = [1, 1]} : vector<8x8xf32> to vector<8x4xf32>
    %cst_21 = arith.constant -5.000000e+00 : f32
    %cst_22 = arith.constant 2.000000e+00 : f32
    %28 = vector.broadcast %cst_21 : f32 to vector<8x4xf32>
    %29 = arith.maximumf %28, %27 : vector<8x4xf32>
    %30 = vector.broadcast %cst_22 : f32 to vector<8x4xf32>
    %31 = arith.minimumf %30, %29 : vector<8x4xf32>
    %32 = math.exp %31 : vector<8x4xf32>
    %c0_23 = arith.constant 0 : index
    %c0_24 = arith.constant 0 : index
    %33 = vector.load %arg3[%c0_23, %c0_24] : memref<8x4xf32, #tpu.memory_space<vmem>>, vector<8x4xf32>
    %34 = arith.mulf %32, %33 : vector<8x4xf32>
    %35 = arith.addf %26, %34 : vector<8x4xf32>
    %36 = math.tanh %35 : vector<8x4xf32>
    %cst_25 = arith.constant -5.000000e-01 : f32
    %37 = vector.broadcast %cst_25 : f32 to vector<8x4xf32>
    %38 = arith.mulf %37, %33 : vector<8x4xf32>
    %39 = arith.mulf %38, %33 : vector<8x4xf32>
    %40 = arith.subf %39, %31 : vector<8x4xf32>
    %cst_26 = arith.constant 0.918938517 : f32
    %41 = vector.broadcast %cst_26 : f32 to vector<8x4xf32>
    %42 = arith.subf %40, %41 : vector<8x4xf32>
    %cst_27 = arith.constant 0.693147182 : f32
    %43 = vector.broadcast %cst_27 : f32 to vector<8x4xf32>
    %44 = arith.subf %43, %35 : vector<8x4xf32>
    %cst_28 = arith.constant -2.000000e+00 : f32
    %45 = vector.broadcast %cst_28 : f32 to vector<8x4xf32>
    %46 = arith.mulf %45, %35 : vector<8x4xf32>
    %cst_29 = arith.constant 0.000000e+00 : f32
    %47 = vector.broadcast %cst_29 : f32 to vector<8x4xf32>
    %48 = arith.maximumf %46, %47 : vector<8x4xf32>
    %49 = vector.broadcast %cst_29 : f32 to vector<8x4xf32>
    %50 = arith.subf %46, %49 : vector<8x4xf32>
    %51 = arith.cmpf one, %50, %50 : vector<8x4xf32>
    %52 = vector.broadcast %cst_29 : f32 to vector<8x4xf32>
    %53 = arith.addf %46, %52 : vector<8x4xf32>
    %54 = math.absf %50 : vector<8x4xf32>
    %cst_30 = arith.constant 0.000000e+00 : f32
    %55 = vector.broadcast %cst_30 : f32 to vector<8x4xf32>
    %56 = arith.subf %55, %54 : vector<8x4xf32>
    %57 = math.exp %56 : vector<8x4xf32>
    %58 = math.log1p %57 : vector<8x4xf32>
    %59 = arith.addf %48, %58 : vector<8x4xf32>
    %60 = arith.select %51, %53, %59 : vector<8x4xi1>, vector<8x4xf32>
    %61 = arith.subf %44, %60 : vector<8x4xf32>
    %cst_31 = arith.constant 2.000000e+00 : f32
    %62 = vector.broadcast %cst_31 : f32 to vector<8x4xf32>
    %63 = arith.mulf %62, %61 : vector<8x4xf32>
    %64 = arith.subf %42, %63 : vector<8x4xf32>
    %cst_32 = arith.constant dense<0.000000e+00> : vector<8xf32>
    %65 = vector.multi_reduction <add>, %64, %cst_32 [1] : vector<8x4xf32> to vector<8xf32>
    %66 = vector.shape_cast %65 : vector<8xf32> to vector<8x1xf32>
    %67 = math.tanh %26 : vector<8x4xf32>
    %68 = tpu.concatenate %36, %67, %66 in 1 : vector<8x4xf32>, vector<8x4xf32>, vector<8x1xf32> -> vector<8x9xf32>
    %c0_33 = arith.constant 0 : index
    %c0_34 = arith.constant 0 : index
    %69 = vector.load %arg10[%c0_33, %c0_34] : memref<8x9xf32, #tpu.memory_space<vmem>>, vector<8x9xf32>
    tpu.vector_store %arg10[%c0_33, %c0_34], %68 {strides = array<i32>} : memref<8x9xf32, #tpu.memory_space<vmem>>, vector<8x9xf32>,
    return
  }
  func.func @transform_0(%arg0: i32) -> (i32, i32) {
    %c0_i32 = arith.constant 0 : i32
    %c0_i32_0 = arith.constant 0 : i32
    return %arg0, %c0_i32 : i32, i32
  }
  func.func @transform_1(%arg0: i32) -> (i32, i32) {
    %c0_i32 = arith.constant 0 : i32
    %c0_i32_0 = arith.constant 0 : i32
    return %arg0, %c0_i32 : i32, i32
  }
  func.func @transform_2(%arg0: i32) -> (i32, i32) {
    %c0_i32 = arith.constant 0 : i32
    %c0_i32_0 = arith.constant 0 : i32
    return %arg0, %c0_i32 : i32, i32
  }
  func.func @transform_3(%arg0: i32) -> (i32, i32) {
    %c0_i32 = arith.constant 0 : i32
    %c0_i32_0 = arith.constant 0 : i32
    %c0_i32_1 = arith.constant 0 : i32
    return %c0_i32, %c0_i32_0 : i32, i32
  }
  func.func @transform_4(%arg0: i32) -> (i32, i32) {
    %c0_i32 = arith.constant 0 : i32
    %c0_i32_0 = arith.constant 0 : i32
    %c0_i32_1 = arith.constant 0 : i32
    return %c0_i32, %c0_i32_0 : i32, i32
  }
  func.func @transform_5(%arg0: i32) -> (i32, i32) {
    %c0_i32 = arith.constant 0 : i32
    %c0_i32_0 = arith.constant 0 : i32
    %c0_i32_1 = arith.constant 0 : i32
    return %c0_i32, %c0_i32_0 : i32, i32
  }
  func.func @transform_6(%arg0: i32) -> (i32, i32) {
    %c0_i32 = arith.constant 0 : i32
    %c0_i32_0 = arith.constant 0 : i32
    %c0_i32_1 = arith.constant 0 : i32
    return %c0_i32, %c0_i32_0 : i32, i32
  }
  func.func @transform_7(%arg0: i32) -> (i32, i32) {
    %c0_i32 = arith.constant 0 : i32
    %c0_i32_0 = arith.constant 0 : i32
    %c0_i32_1 = arith.constant 0 : i32
    return %c0_i32, %c0_i32_0 : i32, i32
  }
  func.func @transform_8(%arg0: i32) -> (i32, i32) {
    %c0_i32 = arith.constant 0 : i32
    %c0_i32_0 = arith.constant 0 : i32
    %c0_i32_1 = arith.constant 0 : i32
    return %c0_i32, %c0_i32_0 : i32, i32
  }
  func.func @transform_9(%arg0: i32) -> (i32, i32) {
    %c0_i32 = arith.constant 0 : i32
    %c0_i32_0 = arith.constant 0 : i32
    return %arg0, %c0_i32 : i32, i32
  }
}

</mosaic_0001>

<llo_original>
// kernel: execute_policy_forward.1
$region0: #{execute_policy_forward.1}
  #allocation0 [shape = 'u32[]', space=smem, size = 0x4, offset = 0x4, fixed_abs, tag = 'smem constant byte address 0x4 - core index']
  #allocation1 [shape = 'u32[72,128]{1,0:T(1,128)}', space=vmem, size = 0x9000, scoped, tag = 'internal scratch']
  %s0 = inlined_call_operand.vmem [shape: f32[4,8], index: 0, kind: input, shape index: {}]
  %s1 = inlined_call_operand.vmem [shape: f32[4,8], index: 1, kind: input, shape index: {}]
  %s2 = inlined_call_operand.vmem [shape: f32[4,4], index: 2, kind: input, shape index: {}]
  %s3 = inlined_call_operand.hbm [shape: f32[16,32], index: 3, kind: input, shape index: {}]
  %s4 = inlined_call_operand.vmem [shape: f32[1,32], index: 4, kind: input, shape index: {}]
  %s5 = inlined_call_operand.vmem [shape: f32[32,32], index: 5, kind: input, shape index: {}]
  %s6 = inlined_call_operand.hbm [shape: f32[1,32], index: 6, kind: input, shape index: {}]
  %s7 = inlined_call_operand.vmem [shape: f32[32,8], index: 7, kind: input, shape index: {}]
  %s8 = inlined_call_operand.hbm [shape: f32[1,8], index: 8, kind: input, shape index: {}]
  %s9 = inlined_call_operand.vmem [shape: f32[4,9], index: 9, kind: output, shape index: {}]
  %s10 = sld [smem:[#allocation0]]
  $region88: #{execute_policy_forward.1} parent=0
    _
  %s12 = ssub.s32 1, %s10
  %s13 = scalar_select 0, %s12, %s10
  $region1: #{execute_policy_forward.1} parent=0
    #allocation2 [shape = 'u8[8192]{0}', space=vmem, size = 0x2000, scoped, tag = 'input window, operand 3, single buffered']
    #allocation3 [shape = 's32[1]{0}', space=sflag, size = 0x4, scoped, tag = 'scoped memory for execute_policy_forward.1']
    #allocation4 [shape = 'u8[512]{0}', space=vmem, size = 0x400, scoped, tag = 'input window, operand 6, single buffered']
    #allocation5 [shape = 's32[1]{0}', space=sflag, size = 0x4, scoped, tag = 'scoped memory for execute_policy_forward.1']
    #allocation6 [shape = 'u8[512]{0}', space=vmem, size = 0x400, scoped, tag = 'input window, operand 8, single buffered']
    #allocation7 [shape = 'u8[4096]{0}', space=vmem, size = 0x1000, scoped, tag = 'output window, operand 0, single buffered']
    %14 = vsyncpa [#allocation3], 0
    %15 = vsyncpa [#allocation5], 0
    // Predicated region
    $region2: #{execute_policy_forward.1} parent=1 // pred_check
      _
    $region3: #{execute_policy_forward.1} parent=1 // pred_check_branch
      %17 = sbr.rel (0) target = $region5
    $region4: #{execute_policy_forward.1} parent=1 // pred_region
      _
    $region5: #{execute_policy_forward.1} parent=1 // pred_fallthru
      _
    // Predicated region
    $region6: #{execute_policy_forward.1} parent=1 // pred_check
      _
    $region7: #{execute_policy_forward.1} parent=1 // pred_check_branch
      %19 = sbr.rel (0) target = $region9
    $region8: #{execute_policy_forward.1} parent=1 // pred_region
      _
    $region9: #{execute_policy_forward.1} parent=1 // pred_fallthru
      _
    // Predicated region
    $region10: #{execute_policy_forward.1} parent=1 // pred_check
      _
    $region11: #{execute_policy_forward.1} parent=1 // pred_check_branch
      %21 = sbr.rel (0) target = $region13
    $region12: #{execute_policy_forward.1} parent=1 // pred_region
      _
    $region13: #{execute_policy_forward.1} parent=1 // pred_fallthru
      _
    // Predicated region
    $region14: #{execute_policy_forward.1} parent=1 // pred_check
      _
    $region15: #{execute_policy_forward.1} parent=1 // pred_check_branch
      %23 = sbr.rel (0) target = $region17
    $region16: #{execute_policy_forward.1} parent=1 // pred_region
      %25 = vsyncadd [#allocation3], 0
      %s26 = sshll.u32 %s3, 4
      %s27 = int_to_ptr.hbm [resolvable:$true] %s26
      %s28 = sshll.u32 [#allocation2], 4
      %s29 = int_to_ptr.vmem [resolvable:$true] %s28
      %34 = dma.hbm_to_vmem [thread:$0]  %s27, 256, %s29, [#allocation3], 128, 128, 8
    $region17: #{execute_policy_forward.1} parent=1 // pred_fallthru
      _
    // Predicated region
    $region18: #{execute_policy_forward.1} parent=1 // pred_check
      _
    $region19: #{execute_policy_forward.1} parent=1 // pred_check_branch
      %36 = sbr.rel (0) target = $region21
    $region20: #{execute_policy_forward.1} parent=1 // pred_region
      _
    $region21: #{execute_policy_forward.1} parent=1 // pred_fallthru
      _
    // Predicated region
    $region22: #{execute_policy_forward.1} parent=1 // pred_check
      _
    $region23: #{execute_policy_forward.1} parent=1 // pred_check_branch
      %38 = sbr.rel (0) target = $region25
    $region24: #{execute_policy_forward.1} parent=1 // pred_region
      _
    $region25: #{execute_policy_forward.1} parent=1 // pred_fallthru
      _
    // Predicated region
    $region26: #{execute_policy_forward.1} parent=1 // pred_check
      _
    $region27: #{execute_policy_forward.1} parent=1 // pred_check_branch
      %40 = sbr.rel (0) target = $region29
    $region28: #{execute_policy_forward.1} parent=1 // pred_region
      %42 = vsyncadd [#allocation5], 0
      %s44 = sshll.u32 %s6, 4
      %s45 = int_to_ptr.hbm [resolvable:$true] %s44
      %s46 = sshll.u32 [#allocation4], 4
      %s47 = int_to_ptr.vmem [resolvable:$true] %s46
      %49 = dma.hbm_to_vmem [thread:$0]  %s45, 16, %s47, [#allocation5]
    $region29: #{execute_policy_forward.1} parent=1 // pred_fallthru
      _
    // Predicated region
    $region30: #{execute_policy_forward.1} parent=1 // pred_check
      _
    $region31: #{execute_policy_forward.1} parent=1 // pred_check_branch
      %51 = sbr.rel (0) target = $region33
    $region32: #{execute_policy_forward.1} parent=1 // pred_region
      _
    $region33: #{execute_policy_forward.1} parent=1 // pred_fallthru
      _
    // Predicated region
    $region34: #{execute_policy_forward.1} parent=1 // pred_check
      _
    $region35: #{execute_policy_forward.1} parent=1 // pred_check_branch
      %53 = sbr.rel (0) target = $region37
    $region36: #{execute_policy_forward.1} parent=1 // pred_region
      %55 = vsyncadd [#allocation5], 0
      %s57 = sshll.u32 %s8, 4
      %s58 = int_to_ptr.hbm [resolvable:$true] %s57
      %s59 = sshll.u32 [#allocation6], 4
      %s60 = int_to_ptr.vmem [resolvable:$true] %s59
      %62 = dma.hbm_to_vmem [thread:$0]  %s58, 16, %s60, [#allocation5]
    $region37: #{execute_policy_forward.1} parent=1 // pred_fallthru
      _
    // Predicated region
    $region38: #{execute_policy_forward.1} parent=1 // pred_check
      _
    $region39: #{execute_policy_forward.1} parent=1 // pred_check_branch
      %64 = sbr.rel (0) target = $region41
    $region40: #{execute_policy_forward.1} parent=1 // pred_region
      %66 = dma.done [#allocation3], 256
    $region41: #{execute_policy_forward.1} parent=1 // pred_fallthru
      _
    // Predicated region
    $region42: #{execute_policy_forward.1} parent=1 // pred_check
      _
    $region43: #{execute_policy_forward.1} parent=1 // pred_check_branch
      %68 = sbr.rel (0) target = $region45
    $region44: #{execute_policy_forward.1} parent=1 // pred_region
      %70 = dma.done [#allocation5], 16
    $region45: #{execute_policy_forward.1} parent=1 // pred_fallthru
      _
    // Predicated region
    $region46: #{execute_policy_forward.1} parent=1 // pred_check
      _
    $region47: #{execute_policy_forward.1} parent=1 // pred_check_branch
      %72 = sbr.rel (0) target = $region49
    $region48: #{execute_policy_forward.1} parent=1 // pred_region
      %74 = dma.done [#allocation5], 16
    $region49: #{execute_policy_forward.1} parent=1 // pred_fallthru
      _
    %v75 = vld [vmem:[%s0] sm:$0xff]
    %v76 = vld [vmem:[%s1] sm:$0xff]
    %78 = vrot.lane.b32.xlu0 %v76, 8
    %v79 = vpop.permute.xlu0 %78
    %vm81 = vcmask 64512
    %v82 = vsel %vm81, %v75, %v79
    %v83 = vld [vmem:[#allocation2] sm:$0xff]
    %v84 = vld [vmem:[#allocation2 + $0x8] sm:$0xff]
    %v85 = vld [vmem:[%s4] sm:$0x1]
    %v87 = vperm.slane %v85, 0
    %vm89 = vcmask 130048
    %v91 = vsel %vm89, %v82, 0
    %93 = vmatpush.msra.mxu0 0.0
    %94 = vmatpush.msra.mxu0 0.0
    %95 = vmatpush.msra.mxu0 0.0
    %96 = vmatpush.msra.mxu0 0.0
    %97 = vmatpush.msra.mxu0 0.0
    %98 = vmatpush.msra.mxu0 0.0
    %99 = vmatpush.msra.mxu0 0.0
    %100 = vmatpush.msra.mxu0 0.0
    %101 = vmatpush.msra.mxu0 0.0
    %102 = vmatpush.msra.mxu0 0.0
    %103 = vmatpush.msra.mxu0 0.0
    %104 = vmatpush.msra.mxu0 0.0
    %105 = vmatpush.msra.mxu0 0.0
    %106 = vmatpush.msra.mxu0 0.0
    %107 = vmatpush.msra.mxu0 %v84
    %108 = vmatpush.msra.mxu0 %v83
    %109 = vmatmul.f32.gmra.mxu0 %v91
    %v110 = vpop.f32.mrf.mxu0
    %v111 = vadd.f32 %v87, %v110
    %112 = vdwg.mxu0
    %v113 = vmax.f32 %v111, 0.0
    %v114 = vld [vmem:[%s5] sm:$0xff]
    %v115 = vld [vmem:[%s5 + $0x8] sm:$0xff]
    %v116 = vld [vmem:[%s5 + $0x10] sm:$0xff]
    %v117 = vld [vmem:[%s5 + $0x18] sm:$0xff]
    %v118 = vld [vmem:[#allocation4] sm:$0x1]
    %v120 = vperm.slane %v118, 0
    %vm122 = vcmask 261120
    %v124 = vsel %vm122, %v113, 0
    %126 = vmatpush.msra.mxu0 0.0
    %127 = vmatpush.msra.mxu0 0.0
    %128 = vmatpush.msra.mxu0 0.0
    %129 = vmatpush.msra.mxu0 0.0
    %130 = vmatpush.msra.mxu0 0.0
    %131 = vmatpush.msra.mxu0 0.0
    %132 = vmatpush.msra.mxu0 0.0
    %133 = vmatpush.msra.mxu0 0.0
    %134 = vmatpush.msra.mxu0 0.0
    %135 = vmatpush.msra.mxu0 0.0
    %136 = vmatpush.msra.mxu0 0.0
    %137 = vmatpush.msra.mxu0 0.0
    %138 = vmatpush.msra.mxu0 %v117
    %139 = vmatpush.msra.mxu0 %v116
    %140 = vmatpush.msra.mxu0 %v115
    %141 = vmatpush.msra.mxu0 %v114
    %142 = vmatmul.f32.gmra.mxu0 %v124
    %v143 = vpop.f32.mrf.mxu0
    %v144 = vadd.f32 %v120, %v143
    %145 = vdwg.mxu0
    %v146 = vmax.f32 %v144, 0.0
    %v147 = vld [vmem:[%s7] sm:$0xff]
    %v148 = vld [vmem:[%s7 + $0x8] sm:$0xff]
    %v149 = vld [vmem:[%s7 + $0x10] sm:$0xff]
    %v150 = vld [vmem:[%s7 + $0x18] sm:$0xff]
    %v151 = vld [vmem:[#allocation6] sm:$0x1]
    %v153 = vperm.slane %v151, 0
    %v156 = vsel %vm122, %v146, 0
    %158 = vmatpush.msra.mxu0 0.0
    %159 = vmatpush.msra.mxu0 0.0
    %160 = vmatpush.msra.mxu0 0.0
    %161 = vmatpush.msra.mxu0 0.0
    %162 = vmatpush.msra.mxu0 0.0
    %163 = vmatpush.msra.mxu0 0.0
    %164 = vmatpush.msra.mxu0 0.0
    %165 = vmatpush.msra.mxu0 0.0
    %166 = vmatpush.msra.mxu0 0.0
    %167 = vmatpush.msra.mxu0 0.0
    %168 = vmatpush.msra.mxu0 0.0
    %169 = vmatpush.msra.mxu0 0.0
    %170 = vmatpush.msra.mxu0 %v150
    %171 = vmatpush.msra.mxu0 %v149
    %172 = vmatpush.msra.mxu0 %v148
    %173 = vmatpush.msra.mxu0 %v147
    %174 = vmatmul.f32.gmra.mxu0 %v156
    %v175 = vpop.f32.mrf.mxu0
    %v176 = vadd.f32 %v153, %v175
    %177 = vdwg.mxu0
    %v178 = vmax.f32 %v176, -9.0
    %v179 = vmin.f32 %v178, 9.0
    %v180 = vmax.f32 %v176, -5.0
    %v181 = vmin.f32 %v180, 2.0
    %v182 = vmul.f32 %v181, 1.442695
    %v183 = vpow.pop %v182
    %v184 = vld [vmem:[%s2] sm:$0xff]
    %186 = vrot.lane.b32.xlu0 %v184, 4
    %v187 = vpop.permute.xlu0 %186
    %v189 = vmul.f32 %v183, %v187
    %191 = vrot.lane.b32.xlu0 %v189, 124
    %v192 = vpop.permute.xlu0 %191
    %v194 = vadd.f32 %v179, %v192
    %v195 = vtanh.pop %v194
    %v196 = vmul.f32 %v184, -0.5
    %v197 = vmul.f32 %v196, %v184
    %199 = vrot.lane.b32.xlu0 %v181, 124
    %v200 = vpop.permute.xlu0 %199
    %v202 = vsub.f32 %v197, %v200
    %v203 = vsub.f32 %v202, 0.9189385
    %v204 = vsub.f32 0.6931472, %v194
    %v205 = vmul.f32 %v194, -2.0
    %v206 = vmax.f32 %v205, 0.0
    %vm207 = vcmp.ne.f32.partialorder %v205, %v205
    %v208 = vadd.f32 %v205, 0.0
    %v209 = vand.u32 2147483647, %v205
    %v210 = vsub.f32 0.0, %v209
    %v211 = vmul.f32 %v210, 1.442695
    %v212 = vpow.pop %v211
    %v213 = vadd.f32 %v212, 1.0
    %v214 = vlog2.pop %v213
    %v215 = vmul.f32 %v214, 0.6931472
    %v216 = vmul.f32 -0.5, %v212
    %v217 = vadd.f32 %v216, 1.0
    %v218 = vmul.f32 %v217, %v212
    %v219 = vand.u32 2147483647, %v212
    %vm220 = vcmp.lt.f32.partialorder %v219, 0.0004427343
    %v221 = vsel %vm220, %v218, %v215
    %v222 = vadd.f32 %v206, %v221
    %v223 = vsel %vm207, %v208, %v222
    %v224 = vsub.f32 %v204, %v223
    %v225 = vmul.f32 %v224, 2.0
    %v226 = vsub.f32 %v203, %v225
    %vm227 = vcmask 31744
    %v228 = vsel %vm227, %v226, 0.0
    %229 = vadd.xlane.f32.xlu0 %v228
    %v230 = vpop.xlane.xlu0 %229
    %v231 = vtanh.pop %v179
    %233 = vrot.lane.b32.xlu0 %v231, 4
    %v234 = vpop.permute.xlu0 %233
    %v236 = vsel %vm227, %v195, %v234
    %v237 = vsel %vm81, %v236, %v230
    %vm238 = vcmask 72704
    %239 = vst.msk [vmem:[#allocation7] sm:$0xff] %vm238, %v237
    // Predicated region
    $region50: #{execute_policy_forward.1} parent=1 // pred_check
      _
    $region51: #{execute_policy_forward.1} parent=1 // pred_check_branch
      %241 = sbr.rel (0) target = $region53
    $region52: #{execute_policy_forward.1} parent=1 // pred_region
      // Predicated region
      $region54: #{execute_policy_forward.1} parent=52 // pred_check
        _
      $region55: #{execute_policy_forward.1} parent=52 // pred_check_branch
        %243 = sbr.rel (0) target = $region57
      $region56: #{execute_policy_forward.1} parent=52 // pred_region
        // Predicated region
        $region58: #{execute_policy_forward.1} parent=56 // pred_check
          _
        $region59: #{execute_policy_forward.1} parent=56 // pred_check_branch
          %245 = sbr.rel target = $region61
        $region60: #{execute_policy_forward.1} parent=56 // pred_region
          // Predicated region
          $region73: #{execute_policy_forward.1} parent=60 // pred_check
            _
          $region74: #{execute_policy_forward.1} parent=60 // pred_check_branch
            %261 = sbr.rel (0) target = $region76
          $region75: #{execute_policy_forward.1} parent=60 // pred_region
            %s263 = ssub.s32 16, 1
            loop: start=0, step=1, limit=1
            $region77: #{execute_policy_forward.1} parent=75 // loop_pre_header
              _
            $region78: #{execute_policy_forward.1} parent=75 // loop_header
              %s265 = sphi 0, %s269
              %p266 = scmp.ge.s32.totalorder %s265, 1
              %s270 = sphi [#allocation7], [#allocation7]
              %s271 = sphi %s9, %s9
            $region79: #{execute_policy_forward.1} parent=75 // loop_header_branch
              %268 = sbr.rel (%p266) target = $region83
            $region80: #{execute_policy_forward.1} parent=75 // loop_body
              %v272 = vld [vmem:[%s270] sm:%s263]
              %273 = vst [vmem:[%s271] sm:%s263] %v272
            $region81: #{execute_policy_forward.1} parent=75 // loop_footer
              %s269 = sadd.s32 1, %s265
            $region82: #{execute_policy_forward.1} parent=75 // loop_footer_branch
              %264 = sbr.rel target = $region78
            $region83: #{execute_policy_forward.1} parent=75 // loop_exit
              _
          $region76: #{execute_policy_forward.1} parent=60 // pred_fallthru
            _
        $region61: #{execute_policy_forward.1} parent=56 // pred_fallthru
          _
        // Predicated region
        $region62: #{execute_policy_forward.1} parent=56 // pred_check
          _
        $region63: #{execute_policy_forward.1} parent=56 // pred_check_branch
          %247 = sbr.rel (0) target = $region65
        $region64: #{execute_policy_forward.1} parent=56 // pred_region
          %s249 = ssub.s32 16, 1
          loop: start=0, step=1, limit=1
          $region66: #{execute_policy_forward.1} parent=64 // loop_pre_header
            _
          $region67: #{execute_policy_forward.1} parent=64 // loop_header
            %s251 = sphi 0, %s255
            %p252 = scmp.ge.s32.totalorder %s251, 1
            %s256 = sphi [#allocation7], [#allocation7]
            %s257 = sphi %s9, %s9
          $region68: #{execute_policy_forward.1} parent=64 // loop_header_branch
            %254 = sbr.rel (%p252) target = $region72
          $region69: #{execute_policy_forward.1} parent=64 // loop_body
            %v258 = vld [vmem:[%s256] sm:%s249]
            %259 = vst [vmem:[%s257] sm:%s249] %v258
          $region70: #{execute_policy_forward.1} parent=64 // loop_footer
            %s255 = sadd.s32 1, %s251
          $region71: #{execute_policy_forward.1} parent=64 // loop_footer_branch
            %250 = sbr.rel target = $region67
          $region72: #{execute_policy_forward.1} parent=64 // loop_exit
            _
        $region65: #{execute_policy_forward.1} parent=56 // pred_fallthru
          _
      $region57: #{execute_policy_forward.1} parent=52 // pred_fallthru
        _
      %274 = vnop
    $region53: #{execute_policy_forward.1} parent=1 // pred_fallthru
      _
    // Predicated region
    $region84: #{execute_policy_forward.1} parent=1 // pred_check
      _
    $region85: #{execute_policy_forward.1} parent=1 // pred_check_branch
      %276 = sbr.rel (0) target = $region87
    $region86: #{execute_policy_forward.1} parent=1 // pred_region
      _
    $region87: #{execute_policy_forward.1} parent=1 // pred_fallthru
      _
    %277 = vsyncpa [#allocation3], 1
    %278 = vsyncpa [#allocation5], 1

</llo_original>
